<compile_context>
chip_gen: v7x
topology: tpu7x:2x2x1
jax: 0.10.0
libtpu: 0.0.40
codegen_flags: <defaults>
</compile_context>

<pallas_src>
import functools
import math

import jax
import jax.numpy as jnp
from jax import lax
from jax.experimental import pallas as pl
from jax.experimental.pallas import tpu as pltpu


# ----------------------------------------------------------------------------
# helpers
# ----------------------------------------------------------------------------
def _silu(x):
    return x * jax.nn.sigmoid(x)


def _layer_norm(v, gamma, beta, eps=1e-6):
    mu = jnp.mean(v, axis=-1, keepdims=True)
    var = jnp.mean((v - mu) ** 2, axis=-1, keepdims=True)
    return (v - mu) * lax.rsqrt(var + eps) * gamma + beta


def sinusoidal_timestep_embedding(timesteps, num_channels=256):
    # Timesteps(num_channels=256, flip_sin_to_cos=True, downscale_freq_shift=0)
    half = num_channels // 2
    exponent = -math.log(10000.0) * jnp.arange(half, dtype=jnp.float32) / float(half)
    freqs = jnp.exp(exponent)
    args = timesteps.astype(jnp.float32)[:, None] * freqs[None, :]
    # flip_sin_to_cos=True -> [cos | sin]
    return jnp.concatenate([jnp.cos(args), jnp.sin(args)], axis=-1)


# ----------------------------------------------------------------------------
# Pallas kernels
# ----------------------------------------------------------------------------
def time_text_kernel(tp_ref, pooled_ref,
                     te_w1_ref, te_b1_ref, te_w2_ref, te_b2_ref,
                     tx_w1_ref, tx_b1_ref, tx_w2_ref, tx_b2_ref,
                     out_ref):
    bf16 = jnp.bfloat16
    # timestep_embedder: Linear(256,H) -> SiLU -> Linear(H,H)   (bf16 MXU, f32 acc)
    tp = tp_ref[...].astype(bf16)
    h = _silu(jnp.dot(tp, te_w1_ref[...], preferred_element_type=jnp.float32)
              + te_b1_ref[...])
    te = (jnp.dot(h.astype(bf16), te_w2_ref[...],
                  preferred_element_type=jnp.float32) + te_b2_ref[...])
    # text_embedder (PixArtAlphaTextProjection, silu): Linear(Cin,H)->SiLU->Linear(H,H)
    pooled = pooled_ref[...].astype(bf16)
    g = _silu(jnp.dot(pooled, tx_w1_ref[...], preferred_element_type=jnp.float32)
              + tx_b1_ref[...])
    pe = (jnp.dot(g.astype(bf16), tx_w2_ref[...],
                  preferred_element_type=jnp.float32) + tx_b2_ref[...])
    out_ref[...] = te + pe


def adanorm_gates_kernel(temb_ref, wg_ref, bg_ref, out_ref):
    # HunyuanVideoAdaNorm: Linear(SiLU(temb)) per layer, computed once for all
    # layers (outside the refiner hot loop).
    t = _silu(temb_ref[...]).astype(jnp.bfloat16)                 # [B, H]
    out_ref[0] = (jnp.dot(t, wg_ref[0], preferred_element_type=jnp.float32)
                  + bg_ref[0])                                    # [B, 2H]


def proj_in_kernel(x_ref, w_ref, b_ref, o_ref):
    # proj_in: Linear(Cin, H) — kept out of the refiner hot loop so its weight
    # does not sit resident in VMEM across the layer loop.
    o_ref[0] = (jnp.dot(x_ref[0].astype(jnp.bfloat16), w_ref[...],
                        preferred_element_type=jnp.float32) + b_ref[...])


def refiner_block_kernel(x_hbm_ref, gates_ref,
                         ln1_g_ref, ln1_b_ref, wqkv_ref, bqkv_ref, wo_ref, bo_ref,
                         ln2_g_ref, ln2_b_ref, wf1_ref, bf1_ref, wf2_ref, bf2_ref,
                         o_ref,
                         x_scr, dma_sem,
                         *, num_heads, head_dim):
    bf16 = jnp.bfloat16
    H = num_heads * head_dim
    layer = pl.program_id(0)
    b = pl.program_id(1)

    # Activation enters VMEM exactly once per batch element (at layer 0) and
    # then stays resident in the scratch across the whole layer loop.
    @pl.when(layer == 0)
    def _():
        cp = pltpu.make_async_copy(x_hbm_ref.at[b], x_scr.at[b], dma_sem)
        cp.start()
        cp.wait()

    x = x_scr[b]                                                  # [L, H] f32
    g = gates_ref[0, 0]                                           # [1, 2H] (precomputed)
    gate_msa = g[:, :H]
    gate_mlp = g[:, H:]

    # ---- norm1 + self-attention (fused QKV; 1/sqrt(hd) pre-folded into W_q) --
    nx = _layer_norm(x, ln1_g_ref[0], ln1_b_ref[0]).astype(bf16)
    qkv = (jnp.dot(nx, wqkv_ref[0], preferred_element_type=jnp.float32)
           + bqkv_ref[0])                                         # [L, 3H] f32

    q = qkv[:, 0 * H:1 * H]
    k = qkv[:, 1 * H:2 * H]
    v = qkv[:, 2 * H:3 * H]
    # TODO(synk): at production num_heads (~24) replace the per-head stack /
    # concat with a reshape + pltpu.einshape head-major relayout.
    q3 = jnp.stack([q[:, h * head_dim:(h + 1) * head_dim]
                    for h in range(num_heads)], axis=0).astype(bf16)
    k3 = jnp.stack([k[:, h * head_dim:(h + 1) * head_dim]
                    for h in range(num_heads)], axis=0).astype(bf16)
    v3 = jnp.stack([v[:, h * head_dim:(h + 1) * head_dim]
                    for h in range(num_heads)], axis=0).astype(bf16)

    s = jnp.einsum('hqd,hkd->hqk', q3, k3,
                   preferred_element_type=jnp.float32)            # [nh, L, L]
    s = s - jnp.max(s, axis=-1, keepdims=True)
    pr = jnp.exp(s)
    pr = pr / jnp.sum(pr, axis=-1, keepdims=True)                 # exact softmax
    o3 = jnp.einsum('hqk,hkd->hqd', pr.astype(bf16), v3,
                    preferred_element_type=jnp.float32)           # [nh, L, hd]
    attn = jnp.concatenate([o3[h] for h in range(num_heads)], axis=-1)
    attn = (jnp.dot(attn.astype(bf16), wo_ref[0],
                    preferred_element_type=jnp.float32) + bo_ref[0])

    x = x + attn * gate_msa

    # ---- norm2 + FeedForward ('linear-silu': Linear -> SiLU -> Linear) ------
    nx2 = _layer_norm(x, ln2_g_ref[0], ln2_b_ref[0]).astype(bf16)
    ffh = _silu(jnp.dot(nx2, wf1_ref[0], preferred_element_type=jnp.float32)
                + bf1_ref[0])
    ffo = (jnp.dot(ffh.astype(bf16), wf2_ref[0],
                   preferred_element_type=jnp.float32) + bf2_ref[0])

    x = x + ffo * gate_mlp
    x_scr[b] = x                                                  # stays resident
    o_ref[0] = x.astype(o_ref.dtype)


# ----------------------------------------------------------------------------
# pallas_call wrappers
# ----------------------------------------------------------------------------
def time_text_embed(p, tp, pooled):
    # TODO(synk): at production H, tile the output-H columns and raise
    # vmem_limit_bytes (the full-block version fits only at small H).
    B = tp.shape[0]
    H = p["te_w2"].shape[1]
    args = [tp, pooled,
            p["te_w1"], p["te_b1"], p["te_w2"], p["te_b2"],
            p["tx_w1"], p["tx_b1"], p["tx_w2"], p["tx_b2"]]

    def full(shape):
        n = len(shape)
        return pl.BlockSpec(shape, lambda *_: (0,) * n)

    return pl.pallas_call(
        time_text_kernel,
        grid=(1,),
        in_specs=[full(a.shape) for a in args],
        out_specs=pl.BlockSpec((B, H), lambda i: (0, 0)),
        out_shape=jax.ShapeDtypeStruct((B, H), jnp.float32),
    )(*args)


def adanorm_gates(p, temb):
    """Precompute the per-layer AdaNorm gates [num_layers, B, 2H] once."""
    B, H = temb.shape
    num_layers = p["wg"].shape[0]
    return pl.pallas_call(
        adanorm_gates_kernel,
        grid=(num_layers,),
        in_specs=[pl.BlockSpec((B, H), lambda l: (0, 0)),
                  pl.BlockSpec((1, H, 2 * H), lambda l: (l, 0, 0)),
                  pl.BlockSpec((1, 1, 2 * H), lambda l: (l, 0, 0))],
        out_specs=pl.BlockSpec((1, B, 2 * H), lambda l: (l, 0, 0)),
        out_shape=jax.ShapeDtypeStruct((num_layers, B, 2 * H), jnp.float32),
        compiler_params=pltpu.CompilerParams(dimension_semantics=("arbitrary",)),
    )(temb, p["wg"], p["bg"])


def proj_in(p, x):
    B, L, Cin = x.shape
    H = p["pi_w"].shape[1]
    return pl.pallas_call(
        proj_in_kernel,
        grid=(B,),
        in_specs=[pl.BlockSpec((1, L, Cin), lambda b: (b, 0, 0)),
                  pl.BlockSpec((Cin, H), lambda b: (0, 0)),
                  pl.BlockSpec((1, H), lambda b: (0, 0))],
        out_specs=pl.BlockSpec((1, L, H), lambda b: (b, 0, 0)),
        out_shape=jax.ShapeDtypeStruct((B, L, H), jnp.float32),
        compiler_params=pltpu.CompilerParams(dimension_semantics=("parallel",)),
    )(x, p["pi_w"], p["pi_b"])


def refiner_stack(p, x_proj, gates, *, num_heads, head_dim):
    """All refiner blocks in one pallas_call.

    grid = (num_layers, B), layer axis OUTER: every per-layer weight block keeps
    the same block index across the inner batch axis, so each layer's weights
    are streamed from HBM once per layer (double-buffered against the previous
    layer's compute), not once per batch element.  Activations stay resident in
    a VMEM scratch across all layers; the projected input is DMA'd in manually
    at layer 0 only (memory_space=pl.ANY, no resident copy afterwards).
    """
    B, L, H = x_proj.shape
    num_layers = p["wqkv"].shape[0]
    FF = p["wf1"].shape[-1]

    gates4 = gates[:, :, None, :]                         # [layers, B, 1, 2H]

    lmap = lambda l, b: (l, 0, 0)                         # per-layer weight blocks
    gmap = lambda l, b: (l, b, 0, 0)                      # per-(layer,batch) gates
    omap = lambda l, b: (b, 0, 0)                         # per-batch output block

    kernel = functools.partial(refiner_block_kernel,
                               num_heads=num_heads, head_dim=head_dim)
    in_specs = [
        pl.BlockSpec(memory_space=pl.ANY),                # projected activations (HBM)
        pl.BlockSpec((1, 1, 1, 2 * H), gmap),             # AdaNorm gates (precomputed)
        pl.BlockSpec((1, 1, H), lmap),                    # ln1_g
        pl.BlockSpec((1, 1, H), lmap),                    # ln1_b
        pl.BlockSpec((1, H, 3 * H), lmap),                # wqkv (scale pre-folded)
        pl.BlockSpec((1, 1, 3 * H), lmap),                # bqkv
        pl.BlockSpec((1, H, H), lmap),                    # wo
        pl.BlockSpec((1, 1, H), lmap),                    # bo
        pl.BlockSpec((1, 1, H), lmap),                    # ln2_g
        pl.BlockSpec((1, 1, H), lmap),                    # ln2_b
        pl.BlockSpec((1, H, FF), lmap),                   # wf1
        pl.BlockSpec((1, 1, FF), lmap),                   # bf1
        pl.BlockSpec((1, FF, H), lmap),                   # wf2
        pl.BlockSpec((1, 1, H), lmap),                    # bf2
    ]
    args = [x_proj, gates4,
            p["ln1_g"], p["ln1_b"], p["wqkv"], p["bqkv"], p["wo"], p["bo"],
            p["ln2_g"], p["ln2_b"], p["wf1"], p["bf1"], p["wf2"], p["bf2"]]

    return pl.pallas_call(
        kernel,
        grid=(num_layers, B),
        in_specs=in_specs,
        out_specs=pl.BlockSpec((1, L, H), omap),
        out_shape=jax.ShapeDtypeStruct((B, L, H), jnp.float32),
        scratch_shapes=[pltpu.VMEM((B, L, H), jnp.float32),   # resident activations
                        pltpu.SemaphoreType.DMA],             # layer-0 activation DMA
        compiler_params=pltpu.CompilerParams(
            # Layer axis is sequential (activation carry); batch kept sequential
            # too so weight blocks are not re-streamed per core.
            # TODO(synk): at production sizes, N-tile wqkv/wf1/wf2 via an extra
            # (parallel) grid axis and raise vmem_limit_bytes; optionally stream
            # int8/fp8 weights with per-channel scales.
            dimension_semantics=("arbitrary", "arbitrary")),
    )(*args)


def hunyuan_video_token_refiner(params, hidden_states, timestep,
                                attention_mask=None, *, num_heads, head_dim):
    # TODO(synk): masked pooling / masked self-attention path (attention_mask != None)
    assert attention_mask is None
    pooled = jnp.mean(hidden_states, axis=1)                     # [B, Cin]   (glue)
    tp = sinusoidal_timestep_embedding(timestep, 256)            # [B, 256]   (glue)
    temb = time_text_embed(params, tp, pooled)                   # [B, H]     (Pallas)
    gates = adanorm_gates(params, temb)                          # [Lyr,B,2H] (Pallas)
    x_proj = proj_in(params, hidden_states)                      # [B, L, H]  (Pallas)
    return refiner_stack(params, x_proj, gates,                  # [B, L, H]  (Pallas)
                         num_heads=num_heads, head_dim=head_dim)


# ----------------------------------------------------------------------------
# deterministic parameter init (synthetic weights; shapes match the nn.Module)
# Matmul weights are stored in bf16; biases / layernorm affines in f32.
# Per-layer weights are stacked along a leading layer axis for streaming.
# ----------------------------------------------------------------------------
def init_params(key, in_channels, num_heads, head_dim, num_layers, mlp_ratio=4.0):
    H = num_heads * head_dim
    FF = int(H * mlp_ratio)
    bf16 = jnp.bfloat16
    scale = 1.0 / math.sqrt(head_dim)

    def nrm(k, shape, s=0.02):
        return s * jax.random.normal(k, shape, dtype=jnp.float32)

    keys = iter(jax.random.split(key, 16 + 8 * num_layers))

    wqkv = nrm(next(keys), (num_layers, H, 3 * H))
    # Fold the attention scale 1/sqrt(head_dim) into the Q columns of the fused
    # QKV weight (and, were it nonzero, into the Q bias): removes the in-kernel
    # [L, H] multiply entirely.
    wqkv = wqkv.at[:, :, :H].multiply(scale)

    p = {
        # CombinedTimestepTextProjEmbeddings
        "te_w1": nrm(next(keys), (256, H)).astype(bf16),
        "te_b1": jnp.zeros((1, H), jnp.float32),
        "te_w2": nrm(next(keys), (H, H)).astype(bf16),
        "te_b2": jnp.zeros((1, H), jnp.float32),
        "tx_w1": nrm(next(keys), (in_channels, H)).astype(bf16),
        "tx_b1": jnp.zeros((1, H), jnp.float32),
        "tx_w2": nrm(next(keys), (H, H)).astype(bf16),
        "tx_b2": jnp.zeros((1, H), jnp.float32),
        # proj_in
        "pi_w": nrm(next(keys), (in_channels, H)).astype(bf16),
        "pi_b": jnp.zeros((1, H), jnp.float32),
        # stacked per-layer refiner-block weights
        "ln1_g": jnp.ones((num_layers, 1, H), jnp.float32),
        "ln1_b": jnp.zeros((num_layers, 1, H), jnp.float32),
        "wqkv": wqkv.astype(bf16),                       # fused to_q|to_k|to_v
        "bqkv": jnp.zeros((num_layers, 1, 3 * H), jnp.float32),
        "wo": nrm(next(keys), (num_layers, H, H)).astype(bf16),
        "bo": jnp.zeros((num_layers, 1, H), jnp.float32),
        "ln2_g": jnp.ones((num_layers, 1, H), jnp.float32),
        "ln2_b": jnp.zeros((num_layers, 1, H), jnp.float32),
        "wf1": nrm(next(keys), (num_layers, H, FF)).astype(bf16),
        "bf1": jnp.zeros((num_layers, 1, FF), jnp.float32),
        "wf2": nrm(next(keys), (num_layers, FF, H)).astype(bf16),
        "bf2": jnp.zeros((num_layers, 1, H), jnp.float32),
        # HunyuanVideoAdaNorm(H, 2H)
        "wg": nrm(next(keys), (num_layers, H, 2 * H)).astype(bf16),
        "bg": jnp.zeros((num_layers, 1, 2 * H), jnp.float32),
    }
    return p


# ----------------------------------------------------------------------------
if __name__ == "__main__":
    IN_CHANNELS = 16
    NUM_HEADS = 4
    HEAD_DIM = 8            # hidden_size H = 32
    NUM_LAYERS = 2
    B, L = 2, 8

    key = jax.random.PRNGKey(0)
    k_param, k_x = jax.random.split(key)
    params = init_params(k_param, IN_CHANNELS, NUM_HEADS, HEAD_DIM, NUM_LAYERS)

    hidden_states = jax.random.normal(k_x, (B, L, IN_CHANNELS), dtype=jnp.float32)
    timestep = jnp.array([10.0, 250.0], dtype=jnp.float32)  # LongTensor in torch; cast ok

    out = hunyuan_video_token_refiner(params, hidden_states, timestep,
                                      attention_mask=None,
                                      num_heads=NUM_HEADS, head_dim=HEAD_DIM)
    out = jax.block_until_ready(out)
    assert out.shape == (B, L, NUM_HEADS * HEAD_DIM)
    assert bool(jnp.all(jnp.isfinite(out)))
    print("KERNEL_OK")
</pallas_src>

<mosaic_0001>
module attributes {stable_mosaic.version = 11 : i64} {
  func.func @time_text_kernel(%arg0: i32, %arg1: memref<2x256xf32, #tpu.memory_space<vmem>>, %arg2: memref<2x16xf32, #tpu.memory_space<vmem>>, %arg3: memref<256x32xbf16, #tpu.memory_space<vmem>>, %arg4: memref<1x32xf32, #tpu.memory_space<vmem>>, %arg5: memref<32x32xbf16, #tpu.memory_space<vmem>>, %arg6: memref<1x32xf32, #tpu.memory_space<vmem>>, %arg7: memref<16x32xbf16, #tpu.memory_space<vmem>>, %arg8: memref<1x32xf32, #tpu.memory_space<vmem>>, %arg9: memref<32x32xbf16, #tpu.memory_space<vmem>>, %arg10: memref<1x32xf32, #tpu.memory_space<vmem>>, %arg11: memref<2x32xf32, #tpu.memory_space<vmem>>) attributes {dimension_semantics = [#tpu.dimension_semantics<arbitrary>], iteration_bounds = array<i64: 1>, scalar_prefetch = 0 : i64, scratch_operands = 0 : i64, tpu.core_type = #tpu.core_type<tc>, window_params = [{pipeline_mode = #tpu.pipeline_mode<synchronous>, transform_indices = @transform_0, window_bounds = array<i64: 2, 256>}, {pipeline_mode = #tpu.pipeline_mode<synchronous>, transform_indices = @transform_1, window_bounds = array<i64: 2, 16>}, {pipeline_mode = #tpu.pipeline_mode<synchronous>, transform_indices = @transform_2, window_bounds = array<i64: 256, 32>}, {pipeline_mode = #tpu.pipeline_mode<synchronous>, transform_indices = @transform_3, window_bounds = array<i64: 1, 32>}, {pipeline_mode = #tpu.pipeline_mode<synchronous>, transform_indices = @transform_4, window_bounds = array<i64: 32, 32>}, {pipeline_mode = #tpu.pipeline_mode<synchronous>, transform_indices = @transform_5, window_bounds = array<i64: 1, 32>}, {pipeline_mode = #tpu.pipeline_mode<synchronous>, transform_indices = @transform_6, window_bounds = array<i64: 16, 32>}, {pipeline_mode = #tpu.pipeline_mode<synchronous>, transform_indices = @transform_7, window_bounds = array<i64: 1, 32>}, {pipeline_mode = #tpu.pipeline_mode<synchronous>, transform_indices = @transform_8, window_bounds = array<i64: 32, 32>}, {pipeline_mode = #tpu.pipeline_mode<synchronous>, transform_indices = @transform_9, window_bounds = array<i64: 1, 32>}, {pipeline_mode = #tpu.pipeline_mode<synchronous>, transform_indices = @transform_10, window_bounds = array<i64: 2, 32>}]} {
    %c0 = arith.constant 0 : index
    %c0_0 = arith.constant 0 : index
    %0 = vector.load %arg1[%c0, %c0_0] : memref<2x256xf32, #tpu.memory_space<vmem>>, vector<2x256xf32>
    %1 = arith.truncf %0 : vector<2x256xf32> to vector<2x256xbf16>
    %c0_1 = arith.constant 0 : index
    %c0_2 = arith.constant 0 : index
    %2 = vector.load %arg3[%c0_1, %c0_2] : memref<256x32xbf16, #tpu.memory_space<vmem>>, vector<256x32xbf16>
    %cst = arith.constant dense<0.000000e+00> : vector<2x32xf32>
    %3 = tpu.matmul %1, %2, %cst {dimension_numbers = #tpu.dot_dimension_numbers<[1], [0], [0], [1], [0, 0, 1, 1], [], []>} : vector<2x256xbf16>, vector<256x32xbf16>, vector<2x32xf32> -> vector<2x32xf32>
    %c0_3 = arith.constant 0 : index
    %c0_4 = arith.constant 0 : index
    %4 = vector.load %arg4[%c0_3, %c0_4] : memref<1x32xf32, #tpu.memory_space<vmem>>, vector<1x32xf32>
    %5 = vector.broadcast %4 : vector<1x32xf32> to vector<2x32xf32>
    %6 = arith.addf %3, %5 : vector<2x32xf32>
    %7 = arith.negf %6 : vector<2x32xf32>
    %8 = math.exp %7 : vector<2x32xf32>
    %cst_5 = arith.constant 1.000000e+00 : f32
    %9 = vector.broadcast %cst_5 : f32 to vector<2x32xf32>
    %10 = arith.addf %9, %8 : vector<2x32xf32>
    %11 = arith.divf %9, %10 : vector<2x32xf32>
    %12 = arith.mulf %6, %11 : vector<2x32xf32>
    %13 = arith.truncf %12 : vector<2x32xf32> to vector<2x32xbf16>
    %c0_6 = arith.constant 0 : index
    %c0_7 = arith.constant 0 : index
    %14 = vector.load %arg5[%c0_6, %c0_7] : memref<32x32xbf16, #tpu.memory_space<vmem>>, vector<32x32xbf16>
    %cst_8 = arith.constant dense<0.000000e+00> : vector<2x32xf32>
    %15 = tpu.matmul %13, %14, %cst_8 {dimension_numbers = #tpu.dot_dimension_numbers<[1], [0], [0], [1], [0, 0, 1, 1], [], []>} : vector<2x32xbf16>, vector<32x32xbf16>, vector<2x32xf32> -> vector<2x32xf32>
    %c0_9 = arith.constant 0 : index
    %c0_10 = arith.constant 0 : index
    %16 = vector.load %arg6[%c0_9, %c0_10] : memref<1x32xf32, #tpu.memory_space<vmem>>, vector<1x32xf32>
    %17 = vector.broadcast %16 : vector<1x32xf32> to vector<2x32xf32>
    %18 = arith.addf %15, %17 : vector<2x32xf32>
    %c0_11 = arith.constant 0 : index
    %c0_12 = arith.constant 0 : index
    %19 = vector.load %arg2[%c0_11, %c0_12] : memref<2x16xf32, #tpu.memory_space<vmem>>, vector<2x16xf32>
    %20 = arith.truncf %19 : vector<2x16xf32> to vector<2x16xbf16>
    %c0_13 = arith.constant 0 : index
    %c0_14 = arith.constant 0 : index
    %21 = vector.load %arg7[%c0_13, %c0_14] : memref<16x32xbf16, #tpu.memory_space<vmem>>, vector<16x32xbf16>
    %cst_15 = arith.constant dense<0.000000e+00> : vector<2x32xf32>
    %22 = tpu.matmul %20, %21, %cst_15 {dimension_numbers = #tpu.dot_dimension_numbers<[1], [0], [0], [1], [0, 0, 1, 1], [], []>} : vector<2x16xbf16>, vector<16x32xbf16>, vector<2x32xf32> -> vector<2x32xf32>
    %c0_16 = arith.constant 0 : index
    %c0_17 = arith.constant 0 : index
    %23 = vector.load %arg8[%c0_16, %c0_17] : memref<1x32xf32, #tpu.memory_space<vmem>>, vector<1x32xf32>
    %24 = vector.broadcast %23 : vector<1x32xf32> to vector<2x32xf32>
    %25 = arith.addf %22, %24 : vector<2x32xf32>
    %26 = arith.negf %25 : vector<2x32xf32>
    %27 = math.exp %26 : vector<2x32xf32>
    %cst_18 = arith.constant 1.000000e+00 : f32
    %28 = vector.broadcast %cst_18 : f32 to vector<2x32xf32>
    %29 = arith.addf %28, %27 : vector<2x32xf32>
    %30 = arith.divf %28, %29 : vector<2x32xf32>
    %31 = arith.mulf %25, %30 : vector<2x32xf32>
    %32 = arith.truncf %31 : vector<2x32xf32> to vector<2x32xbf16>
    %c0_19 = arith.constant 0 : index
    %c0_20 = arith.constant 0 : index
    %33 = vector.load %arg9[%c0_19, %c0_20] : memref<32x32xbf16, #tpu.memory_space<vmem>>, vector<32x32xbf16>
    %cst_21 = arith.constant dense<0.000000e+00> : vector<2x32xf32>
    %34 = tpu.matmul %32, %33, %cst_21 {dimension_numbers = #tpu.dot_dimension_numbers<[1], [0], [0], [1], [0, 0, 1, 1], [], []>} : vector<2x32xbf16>, vector<32x32xbf16>, vector<2x32xf32> -> vector<2x32xf32>
    %c0_22 = arith.constant 0 : index
    %c0_23 = arith.constant 0 : index
    %35 = vector.load %arg10[%c0_22, %c0_23] : memref<1x32xf32, #tpu.memory_space<vmem>>, vector<1x32xf32>
    %36 = vector.broadcast %35 : vector<1x32xf32> to vector<2x32xf32>
    %37 = arith.addf %34, %36 : vector<2x32xf32>
    %38 = arith.addf %18, %37 : vector<2x32xf32>
    %c0_24 = arith.constant 0 : index
    %c0_25 = arith.constant 0 : index
    %39 = vector.load %arg11[%c0_24, %c0_25] : memref<2x32xf32, #tpu.memory_space<vmem>>, vector<2x32xf32>
    tpu.vector_store %arg11[%c0_24, %c0_25], %38 {strides = array<i32>} : memref<2x32xf32, #tpu.memory_space<vmem>>, vector<2x32xf32>,
    return
  }
  func.func @transform_0(%arg0: i32) -> (i32, i32) {
    %c0_i32 = arith.constant 0 : i32
    %c0_i32_0 = arith.constant 0 : i32
    %c0_i32_1 = arith.constant 0 : i32
    return %c0_i32, %c0_i32_0 : i32, i32
  }
  func.func @transform_1(%arg0: i32) -> (i32, i32) {
    %c0_i32 = arith.constant 0 : i32
    %c0_i32_0 = arith.constant 0 : i32
    %c0_i32_1 = arith.constant 0 : i32
    return %c0_i32, %c0_i32_0 : i32, i32
  }
  func.func @transform_2(%arg0: i32) -> (i32, i32) {
    %c0_i32 = arith.constant 0 : i32
    %c0_i32_0 = arith.constant 0 : i32
    %c0_i32_1 = arith.constant 0 : i32
    return %c0_i32, %c0_i32_0 : i32, i32
  }
  func.func @transform_3(%arg0: i32) -> (i32, i32) {
    %c0_i32 = arith.constant 0 : i32
    %c0_i32_0 = arith.constant 0 : i32
    %c0_i32_1 = arith.constant 0 : i32
    return %c0_i32, %c0_i32_0 : i32, i32
  }
  func.func @transform_4(%arg0: i32) -> (i32, i32) {
    %c0_i32 = arith.constant 0 : i32
    %c0_i32_0 = arith.constant 0 : i32
    %c0_i32_1 = arith.constant 0 : i32
    return %c0_i32, %c0_i32_0 : i32, i32
  }
  func.func @transform_5(%arg0: i32) -> (i32, i32) {
    %c0_i32 = arith.constant 0 : i32
    %c0_i32_0 = arith.constant 0 : i32
    %c0_i32_1 = arith.constant 0 : i32
    return %c0_i32, %c0_i32_0 : i32, i32
  }
  func.func @transform_6(%arg0: i32) -> (i32, i32) {
    %c0_i32 = arith.constant 0 : i32
    %c0_i32_0 = arith.constant 0 : i32
    %c0_i32_1 = arith.constant 0 : i32
    return %c0_i32, %c0_i32_0 : i32, i32
  }
  func.func @transform_7(%arg0: i32) -> (i32, i32) {
    %c0_i32 = arith.constant 0 : i32
    %c0_i32_0 = arith.constant 0 : i32
    %c0_i32_1 = arith.constant 0 : i32
    return %c0_i32, %c0_i32_0 : i32, i32
  }
  func.func @transform_8(%arg0: i32) -> (i32, i32) {
    %c0_i32 = arith.constant 0 : i32
    %c0_i32_0 = arith.constant 0 : i32
    %c0_i32_1 = arith.constant 0 : i32
    return %c0_i32, %c0_i32_0 : i32, i32
  }
  func.func @transform_9(%arg0: i32) -> (i32, i32) {
    %c0_i32 = arith.constant 0 : i32
    %c0_i32_0 = arith.constant 0 : i32
    %c0_i32_1 = arith.constant 0 : i32
    return %c0_i32, %c0_i32_0 : i32, i32
  }
  func.func @transform_10(%arg0: i32) -> (i32, i32) {
    %c0_i32 = arith.constant 0 : i32
    %c0_i32_0 = arith.constant 0 : i32
    %c0_i32_1 = arith.constant 0 : i32
    return %c0_i32, %c0_i32_0 : i32, i32
  }
}

</mosaic_0001>

<llo_original>
// kernel: tpu_custom_call.1
$region0: #{tpu_custom_call.1}
  #allocation0 [shape = 'u32[]', space=smem, size = 0x4, offset = 0x4, fixed_abs, tag = 'smem constant byte address 0x4 - core index']
  #allocation1 [shape = 'u32[144,128]{1,0:T(1,128)}', space=vmem, size = 0x12000, scoped, tag = 'internal scratch']
  %s0 = inlined_call_operand.vmem [shape: f32[2,256], index: 0, kind: input, shape index: {}]
  %s1 = inlined_call_operand.vmem [shape: f32[2,16], index: 1, kind: input, shape index: {}]
  %s2 = inlined_call_operand.vmem [shape: bf16[256,32], index: 2, kind: input, shape index: {}]
  %s3 = inlined_call_operand.vmem [shape: f32[1,32], index: 3, kind: input, shape index: {}]
  %s4 = inlined_call_operand.vmem [shape: bf16[32,32], index: 4, kind: input, shape index: {}]
  %s5 = inlined_call_operand.vmem [shape: f32[1,32], index: 5, kind: input, shape index: {}]
  %s6 = inlined_call_operand.vmem [shape: bf16[16,32], index: 6, kind: input, shape index: {}]
  %s7 = inlined_call_operand.vmem [shape: f32[1,32], index: 7, kind: input, shape index: {}]
  %s8 = inlined_call_operand.vmem [shape: bf16[32,32], index: 8, kind: input, shape index: {}]
  %s9 = inlined_call_operand.vmem [shape: f32[1,32], index: 9, kind: input, shape index: {}]
  %s10 = inlined_call_operand.hbm [shape: f32[2,32], index: 10, kind: output, shape index: {}]
  %s11 = sld [smem:[#allocation0]]
  $region50: #{tpu_custom_call.1} parent=0
    _
  %s13 = ssub.s32 1, %s11
  %s14 = scalar_select 0, %s13, %s11
  $region1: #{tpu_custom_call.1} parent=0
    #allocation2 [shape = 'u8[1024]{0}', space=vmem, size = 0x400, scoped, tag = 'output window, operand 0, single buffered']
    #allocation3 [shape = 's32[1]{0}', space=sflag, size = 0x4, scoped, tag = 'scoped memory for tpu_custom_call.1']
    %15 = vsyncpa [#allocation3], 0
    // Predicated region
    $region2: #{tpu_custom_call.1} parent=1 // pred_check
      _
    $region3: #{tpu_custom_call.1} parent=1 // pred_check_branch
      %17 = sbr.rel (0) target = $region5
    $region4: #{tpu_custom_call.1} parent=1 // pred_region
      _
    $region5: #{tpu_custom_call.1} parent=1 // pred_fallthru
      _
    // Predicated region
    $region6: #{tpu_custom_call.1} parent=1 // pred_check
      _
    $region7: #{tpu_custom_call.1} parent=1 // pred_check_branch
      %19 = sbr.rel (0) target = $region9
    $region8: #{tpu_custom_call.1} parent=1 // pred_region
      _
    $region9: #{tpu_custom_call.1} parent=1 // pred_fallthru
      _
    // Predicated region
    $region10: #{tpu_custom_call.1} parent=1 // pred_check
      _
    $region11: #{tpu_custom_call.1} parent=1 // pred_check_branch
      %21 = sbr.rel (0) target = $region13
    $region12: #{tpu_custom_call.1} parent=1 // pred_region
      _
    $region13: #{tpu_custom_call.1} parent=1 // pred_fallthru
      _
    // Predicated region
    $region14: #{tpu_custom_call.1} parent=1 // pred_check
      _
    $region15: #{tpu_custom_call.1} parent=1 // pred_check_branch
      %23 = sbr.rel (0) target = $region17
    $region16: #{tpu_custom_call.1} parent=1 // pred_region
      _
    $region17: #{tpu_custom_call.1} parent=1 // pred_fallthru
      _
    // Predicated region
    $region18: #{tpu_custom_call.1} parent=1 // pred_check
      _
    $region19: #{tpu_custom_call.1} parent=1 // pred_check_branch
      %25 = sbr.rel (0) target = $region21
    $region20: #{tpu_custom_call.1} parent=1 // pred_region
      _
    $region21: #{tpu_custom_call.1} parent=1 // pred_fallthru
      _
    // Predicated region
    $region22: #{tpu_custom_call.1} parent=1 // pred_check
      _
    $region23: #{tpu_custom_call.1} parent=1 // pred_check_branch
      %27 = sbr.rel (0) target = $region25
    $region24: #{tpu_custom_call.1} parent=1 // pred_region
      _
    $region25: #{tpu_custom_call.1} parent=1 // pred_fallthru
      _
    // Predicated region
    $region26: #{tpu_custom_call.1} parent=1 // pred_check
      _
    $region27: #{tpu_custom_call.1} parent=1 // pred_check_branch
      %29 = sbr.rel (0) target = $region29
    $region28: #{tpu_custom_call.1} parent=1 // pred_region
      _
    $region29: #{tpu_custom_call.1} parent=1 // pred_fallthru
      _
    // Predicated region
    $region30: #{tpu_custom_call.1} parent=1 // pred_check
      _
    $region31: #{tpu_custom_call.1} parent=1 // pred_check_branch
      %31 = sbr.rel (0) target = $region33
    $region32: #{tpu_custom_call.1} parent=1 // pred_region
      _
    $region33: #{tpu_custom_call.1} parent=1 // pred_fallthru
      _
    // Predicated region
    $region34: #{tpu_custom_call.1} parent=1 // pred_check
      _
    $region35: #{tpu_custom_call.1} parent=1 // pred_check_branch
      %33 = sbr.rel (0) target = $region37
    $region36: #{tpu_custom_call.1} parent=1 // pred_region
      _
    $region37: #{tpu_custom_call.1} parent=1 // pred_fallthru
      _
    // Predicated region
    $region38: #{tpu_custom_call.1} parent=1 // pred_check
      _
    $region39: #{tpu_custom_call.1} parent=1 // pred_check_branch
      %35 = sbr.rel (0) target = $region41
    $region40: #{tpu_custom_call.1} parent=1 // pred_region
      _
    $region41: #{tpu_custom_call.1} parent=1 // pred_fallthru
      _
    %v37 = vld [vmem:[%s0] sm:$0xf]
    %v40 = vunpack.c.l.s4 1983009808
    %v41 = vunpack.c.0.s8 %v40
    %v42 = vlaneseq
    %v43 = vshrl.u32 %v42, 7
    %v44 = vsub.s32 %v41, %v43
    %v45 = vrot.slane %v37, %v44
    %v46 = vcombine.high %v45, %v45
    %v49 = vpack.c.bf16 %v45, %v45
    %v50 = vpack.c.bf16 %v46, %v46
    %v51 = vld [vmem:[%s2] sm:$0xf]
    %v52 = vld [vmem:[%s2 + $0x4] sm:$0xf]
    %v53 = vld [vmem:[%s2 + $0x8] sm:$0xf]
    %v54 = vld [vmem:[%s2 + $0xc] sm:$0xf]
    %v55 = vld [vmem:[%s2 + $0x10] sm:$0xf]
    %v56 = vld [vmem:[%s2 + $0x14] sm:$0xf]
    %v57 = vld [vmem:[%s2 + $0x18] sm:$0xf]
    %v58 = vld [vmem:[%s2 + $0x1c] sm:$0xf]
    %v59 = vld [vmem:[%s2 + $0x20] sm:$0xf]
    %v60 = vld [vmem:[%s2 + $0x24] sm:$0xf]
    %v61 = vld [vmem:[%s2 + $0x28] sm:$0xf]
    %v62 = vld [vmem:[%s2 + $0x2c] sm:$0xf]
    %v63 = vld [vmem:[%s2 + $0x30] sm:$0xf]
    %v64 = vld [vmem:[%s2 + $0x34] sm:$0xf]
    %v65 = vld [vmem:[%s2 + $0x38] sm:$0xf]
    %v66 = vld [vmem:[%s2 + $0x3c] sm:$0xf]
    %v67 = vld [vmem:[%s2 + $0x40] sm:$0xf]
    %v68 = vld [vmem:[%s2 + $0x44] sm:$0xf]
    %v69 = vld [vmem:[%s2 + $0x48] sm:$0xf]
    %v70 = vld [vmem:[%s2 + $0x4c] sm:$0xf]
    %v71 = vld [vmem:[%s2 + $0x50] sm:$0xf]
    %v72 = vld [vmem:[%s2 + $0x54] sm:$0xf]
    %v73 = vld [vmem:[%s2 + $0x58] sm:$0xf]
    %v74 = vld [vmem:[%s2 + $0x5c] sm:$0xf]
    %v75 = vld [vmem:[%s2 + $0x60] sm:$0xf]
    %v76 = vld [vmem:[%s2 + $0x64] sm:$0xf]
    %v77 = vld [vmem:[%s2 + $0x68] sm:$0xf]
    %v78 = vld [vmem:[%s2 + $0x6c] sm:$0xf]
    %v79 = vld [vmem:[%s2 + $0x70] sm:$0xf]
    %v80 = vld [vmem:[%s2 + $0x74] sm:$0xf]
    %v81 = vld [vmem:[%s2 + $0x78] sm:$0xf]
    %v82 = vld [vmem:[%s2 + $0x7c] sm:$0xf]
    %v83 = vld [vmem:[%s3] sm:$0x1]
    %v85 = vlaneseq
    %v86 = vshrl.u32 %v85, 7
    %v87 = vsub.s32 0, %v86
    %v88 = vrot.slane %v83, %v87
    %v122 = vunpack.c.l.b16 %v51
    %v123 = vunpack.c.l.b16 %v52
    %v124 = vunpack.c.l.b16 %v53
    %v125 = vunpack.c.l.b16 %v54
    %v126 = vunpack.c.l.b16 %v55
    %v127 = vunpack.c.l.b16 %v56
    %v128 = vunpack.c.l.b16 %v57
    %v129 = vunpack.c.l.b16 %v58
    %v130 = vunpack.c.l.b16 %v59
    %v131 = vunpack.c.l.b16 %v60
    %v132 = vunpack.c.l.b16 %v61
    %v133 = vunpack.c.l.b16 %v62
    %v134 = vunpack.c.l.b16 %v63
    %v135 = vunpack.c.l.b16 %v64
    %v136 = vunpack.c.l.b16 %v65
    %v137 = vunpack.c.l.b16 %v66
    %v138 = vunpack.c.l.b16 %v67
    %v139 = vunpack.c.l.b16 %v68
    %v140 = vunpack.c.l.b16 %v69
    %v141 = vunpack.c.l.b16 %v70
    %v142 = vunpack.c.l.b16 %v71
    %v143 = vunpack.c.l.b16 %v72
    %v144 = vunpack.c.l.b16 %v73
    %v145 = vunpack.c.l.b16 %v74
    %v146 = vunpack.c.l.b16 %v75
    %v147 = vunpack.c.l.b16 %v76
    %v148 = vunpack.c.l.b16 %v77
    %v149 = vunpack.c.l.b16 %v78
    %v150 = vunpack.c.l.b16 %v79
    %v151 = vunpack.c.l.b16 %v80
    %v152 = vunpack.c.l.b16 %v81
    %v153 = vunpack.c.l.b16 %v82
    %v154 = vpack.c.b16 %v123, %v122
    %v155 = vpack.c.b16 %v125, %v124
    %v156 = vpack.c.b16 %v127, %v126
    %v157 = vpack.c.b16 %v129, %v128
    %v158 = vpack.c.b16 %v131, %v130
    %v159 = vpack.c.b16 %v133, %v132
    %v160 = vpack.c.b16 %v135, %v134
    %v161 = vpack.c.b16 %v137, %v136
    %v162 = vpack.c.b16 %v139, %v138
    %v163 = vpack.c.b16 %v141, %v140
    %v164 = vpack.c.b16 %v143, %v142
    %v165 = vpack.c.b16 %v145, %v144
    %v166 = vpack.c.b16 %v147, %v146
    %v167 = vpack.c.b16 %v149, %v148
    %v168 = vpack.c.b16 %v151, %v150
    %v169 = vpack.c.b16 %v153, %v152
    %186 = vmatprep.subr.bf16.mxu0 0
    %187 = vmatpush1.bf16.msra.mxu0 %v154
    %188 = vmatprep.subr.bf16.mxu0 0
    %189 = vmatpush1.bf16.msra.mxu0 %v155
    %190 = vmatprep.subr.bf16.mxu0 0
    %191 = vmatpush1.bf16.msra.mxu0 %v156
    %192 = vmatprep.subr.bf16.mxu0 0
    %193 = vmatpush1.bf16.msra.mxu0 %v157
    %194 = vmatprep.subr.bf16.mxu0 0
    %195 = vmatpush1.bf16.msra.mxu0 %v158
    %196 = vmatprep.subr.bf16.mxu0 0
    %197 = vmatpush1.bf16.msra.mxu0 %v159
    %198 = vmatprep.subr.bf16.mxu0 0
    %199 = vmatpush1.bf16.msra.mxu0 %v160
    %200 = vmatprep.subr.bf16.mxu0 0
    %201 = vmatpush1.bf16.msra.mxu0 %v161
    %202 = vmatprep.subr.bf16.mxu0 0
    %203 = vmatpush1.bf16.msra.mxu0 %v162
    %204 = vmatprep.subr.bf16.mxu0 0
    %205 = vmatpush1.bf16.msra.mxu0 %v163
    %206 = vmatprep.subr.bf16.mxu0 0
    %207 = vmatpush1.bf16.msra.mxu0 %v164
    %208 = vmatprep.subr.bf16.mxu0 0
    %209 = vmatpush1.bf16.msra.mxu0 %v165
    %210 = vmatprep.subr.bf16.mxu0 0
    %211 = vmatpush1.bf16.msra.mxu0 %v166
    %212 = vmatprep.subr.bf16.mxu0 0
    %213 = vmatpush1.bf16.msra.mxu0 %v167
    %214 = vmatprep.subr.bf16.mxu0 0
    %215 = vmatpush1.bf16.msra.mxu0 %v168
    %216 = vmatprep.subr.bf16.mxu0 0
    %217 = vmatpush1.bf16.msra.mxu0 %v169
    %218 = vmatprep.mubr.bf16.mxu0 %v50
    %219 = vmatmul.mubr.bf16.gmra.mrb[0].mxu0 %v49
    %v220 = vpop.f32.mrb[0].mxu0
    %v221 = vadd.f32 %v88, %v220
    %v222 = vpop.f32.mrb[0].mxu0
    %v223 = vpop.f32.mrb[0].mxu0
    %v224 = vpop.f32.mrb[0].mxu0
    %225 = vdwg.mxu0
    %v226 = vxor.u32 %v221, 2147483648
    %v227 = vmul.f32 %v226, 1.442695
    %v228 = vpow.pop %v227
    %v229 = vadd.f32 %v228, 1.0
    %v230 = vrcp.pop %v229
    %v231 = vmul.f32 1.0, %v230
    %v232 = vmul.f32 %v221, %v231
    %v233 = vpack.c.bf16 %v232, %v232
    %v234 = vld [vmem:[%s4] sm:$0xf]
    %v235 = vld [vmem:[%s4 + $0x4] sm:$0xf]
    %v236 = vld [vmem:[%s4 + $0x8] sm:$0xf]
    %v237 = vld [vmem:[%s4 + $0xc] sm:$0xf]
    %v238 = vld [vmem:[%s5] sm:$0x1]
    %v240 = vlaneseq
    %v241 = vshrl.u32 %v240, 7
    %v242 = vsub.s32 0, %v241
    %v243 = vrot.slane %v238, %v242
    %v249 = vunpack.c.l.b16 %v234
    %v250 = vunpack.c.l.b16 %v235
    %v251 = vunpack.c.l.b16 %v236
    %v252 = vunpack.c.l.b16 %v237
    %v253 = vpack.c.b16 %v250, %v249
    %v254 = vpack.c.b16 %v252, %v251
    %vm257 = vcmask 261120
    %v259 = vsel %vm257, %v233, 0
    %261 = vmatprep.subr.bf16.mxu0 0
    %262 = vmatpush1.bf16.msra.mxu0 %v253
    %263 = vmatprep.subr.bf16.mxu0 0
    %264 = vmatpush1.bf16.msra.mxu0 %v254
    %265 = vmatprep.subr.bf16.mxu0 0
    %266 = vmatpush1.bf16.msra.mxu0 0
    %267 = vmatprep.subr.bf16.mxu0 0
    %268 = vmatpush1.bf16.msra.mxu0 0
    %269 = vmatprep.subr.bf16.mxu0 0
    %270 = vmatpush1.bf16.msra.mxu0 0
    %271 = vmatprep.subr.bf16.mxu0 0
    %272 = vmatpush1.bf16.msra.mxu0 0
    %273 = vmatprep.subr.bf16.mxu0 0
    %274 = vmatpush1.bf16.msra.mxu0 0
    %275 = vmatprep.subr.bf16.mxu0 0
    %276 = vmatpush1.bf16.msra.mxu0 0
    %277 = vmatprep.subr.bf16.mxu0 0
    %278 = vmatpush1.bf16.msra.mxu0 0
    %279 = vmatprep.subr.bf16.mxu0 0
    %280 = vmatpush1.bf16.msra.mxu0 0
    %281 = vmatprep.subr.bf16.mxu0 0
    %282 = vmatpush1.bf16.msra.mxu0 0
    %283 = vmatprep.subr.bf16.mxu0 0
    %284 = vmatpush1.bf16.msra.mxu0 0
    %285 = vmatprep.subr.bf16.mxu0 0
    %286 = vmatpush1.bf16.msra.mxu0 0
    %287 = vmatprep.subr.bf16.mxu0 0
    %288 = vmatpush1.bf16.msra.mxu0 0
    %289 = vmatprep.subr.bf16.mxu0 0
    %290 = vmatpush1.bf16.msra.mxu0 0
    %291 = vmatprep.subr.bf16.mxu0 0
    %292 = vmatpush1.bf16.msra.mxu0 0
    %293 = vmatprep.mubr.bf16.mxu0 0
    %294 = vmatmul.mubr.bf16.gmra.mrb[0].mxu0 %v259
    %v295 = vpop.f32.mrb[0].mxu0
    %v296 = vadd.f32 %v243, %v295
    %v297 = vpop.f32.mrb[0].mxu0
    %v298 = vpop.f32.mrb[0].mxu0
    %v299 = vpop.f32.mrb[0].mxu0
    %300 = vdwg.mxu0
    %v301 = vld [vmem:[%s1] sm:$0x3]
    %v302 = vpack.c.bf16 %v301, %v301
    %v303 = vld [vmem:[%s6] sm:$0xf]
    %v304 = vld [vmem:[%s6 + $0x4] sm:$0xf]
    %v305 = vld [vmem:[%s7] sm:$0x1]
    %v307 = vlaneseq
    %v308 = vshrl.u32 %v307, 7
    %v309 = vsub.s32 0, %v308
    %v310 = vrot.slane %v305, %v309
    %v314 = vunpack.c.l.b16 %v303
    %v315 = vunpack.c.l.b16 %v304
    %v316 = vpack.c.b16 %v315, %v314
    %vm318 = vcmask 130048
    %v320 = vsel %vm318, %v302, 0
    %322 = vmatprep.subr.bf16.mxu0 0
    %323 = vmatpush1.bf16.msra.mxu0 %v316
    %324 = vmatprep.subr.bf16.mxu0 0
    %325 = vmatpush1.bf16.msra.mxu0 0
    %326 = vmatprep.subr.bf16.mxu0 0
    %327 = vmatpush1.bf16.msra.mxu0 0
    %328 = vmatprep.subr.bf16.mxu0 0
    %329 = vmatpush1.bf16.msra.mxu0 0
    %330 = vmatprep.subr.bf16.mxu0 0
    %331 = vmatpush1.bf16.msra.mxu0 0
    %332 = vmatprep.subr.bf16.mxu0 0
    %333 = vmatpush1.bf16.msra.mxu0 0
    %334 = vmatprep.subr.bf16.mxu0 0
    %335 = vmatpush1.bf16.msra.mxu0 0
    %336 = vmatprep.subr.bf16.mxu0 0
    %337 = vmatpush1.bf16.msra.mxu0 0
    %338 = vmatprep.subr.bf16.mxu0 0
    %339 = vmatpush1.bf16.msra.mxu0 0
    %340 = vmatprep.subr.bf16.mxu0 0
    %341 = vmatpush1.bf16.msra.mxu0 0
    %342 = vmatprep.subr.bf16.mxu0 0
    %343 = vmatpush1.bf16.msra.mxu0 0
    %344 = vmatprep.subr.bf16.mxu0 0
    %345 = vmatpush1.bf16.msra.mxu0 0
    %346 = vmatprep.subr.bf16.mxu0 0
    %347 = vmatpush1.bf16.msra.mxu0 0
    %348 = vmatprep.subr.bf16.mxu0 0
    %349 = vmatpush1.bf16.msra.mxu0 0
    %350 = vmatprep.subr.bf16.mxu0 0
    %351 = vmatpush1.bf16.msra.mxu0 0
    %352 = vmatprep.subr.bf16.mxu0 0
    %353 = vmatpush1.bf16.msra.mxu0 0
    %354 = vmatprep.mubr.bf16.mxu0 0
    %355 = vmatmul.mubr.bf16.gmra.mrb[0].mxu0 %v320
    %v356 = vpop.f32.mrb[0].mxu0
    %v357 = vadd.f32 %v310, %v356
    %v358 = vpop.f32.mrb[0].mxu0
    %v359 = vpop.f32.mrb[0].mxu0
    %v360 = vpop.f32.mrb[0].mxu0
    %361 = vdwg.mxu0
    %v362 = vxor.u32 %v357, 2147483648
    %v363 = vmul.f32 %v362, 1.442695
    %v364 = vpow.pop %v363
    %v365 = vadd.f32 %v364, 1.0
    %v366 = vrcp.pop %v365
    %v367 = vmul.f32 1.0, %v366
    %v368 = vmul.f32 %v357, %v367
    %v369 = vpack.c.bf16 %v368, %v368
    %v370 = vld [vmem:[%s8] sm:$0xf]
    %v371 = vld [vmem:[%s8 + $0x4] sm:$0xf]
    %v372 = vld [vmem:[%s8 + $0x8] sm:$0xf]
    %v373 = vld [vmem:[%s8 + $0xc] sm:$0xf]
    %v374 = vld [vmem:[%s9] sm:$0x1]
    %v376 = vlaneseq
    %v377 = vshrl.u32 %v376, 7
    %v378 = vsub.s32 0, %v377
    %v379 = vrot.slane %v374, %v378
    %v385 = vunpack.c.l.b16 %v370
    %v386 = vunpack.c.l.b16 %v371
    %v387 = vunpack.c.l.b16 %v372
    %v388 = vunpack.c.l.b16 %v373
    %v389 = vpack.c.b16 %v386, %v385
    %v390 = vpack.c.b16 %v388, %v387
    %v394 = vsel %vm257, %v369, 0
    %396 = vmatprep.subr.bf16.mxu0 0
    %397 = vmatpush1.bf16.msra.mxu0 %v389
    %398 = vmatprep.subr.bf16.mxu0 0
    %399 = vmatpush1.bf16.msra.mxu0 %v390
    %400 = vmatprep.subr.bf16.mxu0 0
    %401 = vmatpush1.bf16.msra.mxu0 0
    %402 = vmatprep.subr.bf16.mxu0 0
    %403 = vmatpush1.bf16.msra.mxu0 0
    %404 = vmatprep.subr.bf16.mxu0 0
    %405 = vmatpush1.bf16.msra.mxu0 0
    %406 = vmatprep.subr.bf16.mxu0 0
    %407 = vmatpush1.bf16.msra.mxu0 0
    %408 = vmatprep.subr.bf16.mxu0 0
    %409 = vmatpush1.bf16.msra.mxu0 0
    %410 = vmatprep.subr.bf16.mxu0 0
    %411 = vmatpush1.bf16.msra.mxu0 0
    %412 = vmatprep.subr.bf16.mxu0 0
    %413 = vmatpush1.bf16.msra.mxu0 0
    %414 = vmatprep.subr.bf16.mxu0 0
    %415 = vmatpush1.bf16.msra.mxu0 0
    %416 = vmatprep.subr.bf16.mxu0 0
    %417 = vmatpush1.bf16.msra.mxu0 0
    %418 = vmatprep.subr.bf16.mxu0 0
    %419 = vmatpush1.bf16.msra.mxu0 0
    %420 = vmatprep.subr.bf16.mxu0 0
    %421 = vmatpush1.bf16.msra.mxu0 0
    %422 = vmatprep.subr.bf16.mxu0 0
    %423 = vmatpush1.bf16.msra.mxu0 0
    %424 = vmatprep.subr.bf16.mxu0 0
    %425 = vmatpush1.bf16.msra.mxu0 0
    %426 = vmatprep.subr.bf16.mxu0 0
    %427 = vmatpush1.bf16.msra.mxu0 0
    %428 = vmatprep.mubr.bf16.mxu0 0
    %429 = vmatmul.mubr.bf16.gmra.mrb[0].mxu0 %v394
    %v430 = vpop.f32.mrb[0].mxu0
    %v431 = vadd.f32 %v379, %v430
    %v432 = vpop.f32.mrb[0].mxu0
    %v433 = vpop.f32.mrb[0].mxu0
    %v434 = vpop.f32.mrb[0].mxu0
    %435 = vdwg.mxu0
    %v436 = vadd.f32 %v296, %v431
    %vm437 = vcmask 254976
    %438 = vst.msk [vmem:[#allocation2] sm:$0x3] %vm437, %v436
    // Predicated region
    $region42: #{tpu_custom_call.1} parent=1 // pred_check
      _
    $region43: #{tpu_custom_call.1} parent=1 // pred_check_branch
      %440 = sbr.rel (0) target = $region45
    $region44: #{tpu_custom_call.1} parent=1 // pred_region
      %s442 = ssub.s32 32, 32
      %443 = vsyncadd [#allocation3], %s442
      %s445 = sshll.u32 [#allocation2], 4
      %s446 = int_to_ptr.vmem [resolvable:$true] %s445
      %448 = dma.vmem_to_hbm [thread:$0]  %s446, 32, %s10, [#allocation3]
    $region45: #{tpu_custom_call.1} parent=1 // pred_fallthru
      _
    // Predicated region
    $region46: #{tpu_custom_call.1} parent=1 // pred_check
      _
    $region47: #{tpu_custom_call.1} parent=1 // pred_check_branch
      %450 = sbr.rel (0) target = $region49
    $region48: #{tpu_custom_call.1} parent=1 // pred_region
      %451 = dma.done [#allocation3], 32
    $region49: #{tpu_custom_call.1} parent=1 // pred_fallthru
      _
    %452 = vsyncpa [#allocation3], 1

</llo_original>
